<compile_context>
chip_gen: v5e
topology: v5e:2x2
jax: 0.10.0
libtpu: 0.0.40
codegen_flags: <defaults>
</compile_context>

<pallas_src>
import functools

import jax
import jax.numpy as jnp
from jax.experimental import pallas as pl
from jax.experimental.pallas import tpu as pltpu


def _round_up(x, m):
    return ((x + m - 1) // m) * m


def _pow_gamma(x, gamma):
    """x ** gamma without exp/log when gamma is a small non-negative integer."""
    if float(gamma) == int(gamma) and 0.0 <= gamma <= 8.0:
        g = int(gamma)
        if g == 0:
            return jnp.ones_like(x)
        r = x
        for _ in range(g - 1):
            r = r * x
        return r
    return x ** gamma  # general (non-integer) focusing parameter


# ---------------------------------------------------------------------------
# Packed path: C | 128, logits viewed as (R, 128) lane-dense rows.
# ---------------------------------------------------------------------------
def _packed_kernel(logits_ref, t_ref, out_ref, *, gamma, alpha, C, S, R, TR):
    x = logits_ref[...].astype(jnp.float32)          # (TR, 128)
    t_blk = t_ref[...]                                # (TR, S) int32

    lane = jax.lax.broadcasted_iota(jnp.int32, (TR, 128), 1)
    log2c = C.bit_length() - 1                        # C is a power of two here
    cls = (lane & (C - 1)) + 1                        # per-lane class id, 1..C
    grp = lane >> log2c                               # which packed sample, 0..S-1

    # Expand per-sample targets to per-lane values (S lane-broadcasts + selects).
    t_exp = jnp.full((TR, 128), -1, jnp.int32)
    for j in range(S):
        t_exp = jnp.where(grp == j, t_blk[:, j:j + 1], t_exp)

    # Mask rows of a partial tail tile (undefined DMA contents) -> target -1.
    row = jax.lax.broadcasted_iota(jnp.int32, (TR, 1), 0) + pl.program_id(0) * TR
    t_exp = jnp.where(row < R, t_exp, -1)

    p = jax.nn.sigmoid(x)
    term1 = _pow_gamma(1.0 - p, gamma) * jnp.log(p + 1e-6)
    term2 = _pow_gamma(p, gamma) * jnp.log(1.0 - p + 1e-6)

    pos = t_exp == cls
    neg = jnp.logical_and(t_exp >= 0, jnp.logical_not(pos))
    loss = jnp.where(pos, (-alpha) * term1,
                     jnp.where(neg, (alpha - 1.0) * term2, 0.0))

    # Per-block partial sum, reduced with pure vreg adds to a lane-dense (8,128).
    out_ref[...] = loss.reshape(TR // 8, 8, 128).sum(axis=0)


def _packed_path(logits, targets, gamma, alpha, tile_rows):
    N, C = logits.shape
    S = 128 // C
    R = (N * C) // 128
    logits2 = logits.reshape(R, 128)                  # contiguous -> free reshape
    targets2 = targets.reshape(R, S)                  # free reshape

    TR = max(8, min(tile_rows, _round_up(R, 8)))
    num_blocks = pl.cdiv(R, TR)

    out = pl.pallas_call(
        functools.partial(_packed_kernel, gamma=gamma, alpha=alpha,
                          C=C, S=S, R=R, TR=TR),
        out_shape=jax.ShapeDtypeStruct((num_blocks * 8, 128), jnp.float32),
        grid=(num_blocks,),
        in_specs=[
            pl.BlockSpec((TR, 128), lambda i: (i, 0)),   # lane-dense logits
            pl.BlockSpec((TR, S), lambda i: (i, 0)),     # compact targets
        ],
        out_specs=pl.BlockSpec((8, 128), lambda i: (i, 0)),
        compiler_params=pltpu.CompilerParams(
            dimension_semantics=("parallel",)),          # megacore-shardable
    )(logits2, targets2)
    return jnp.sum(out)


# ---------------------------------------------------------------------------
# Fallback path: general C (keeps the (N, C) layout).
# ---------------------------------------------------------------------------
def _rowwise_kernel(logits_ref, t_ref, out_ref, acc_ref, *, gamma, alpha, N, TN):
    @pl.when(pl.program_id(0) == 0)
    def _():
        acc_ref[...] = jnp.zeros_like(acc_ref)

    x = logits_ref[...].astype(jnp.float32)           # (TN, C)
    t = t_ref[...]                                    # (TN, 1) int32

    # Mask rows of a partial tail tile against the true N.
    row = jax.lax.broadcasted_iota(jnp.int32, (TN, 1), 0) + pl.program_id(0) * TN
    t = jnp.where(row < N, t, -1)

    cls = jax.lax.broadcasted_iota(jnp.int32, x.shape, 1) + 1

    p = jax.nn.sigmoid(x)
    term1 = _pow_gamma(1.0 - p, gamma) * jnp.log(p + 1e-6)
    term2 = _pow_gamma(p, gamma) * jnp.log(1.0 - p + 1e-6)

    pos = t == cls
    neg = jnp.logical_and(t >= 0, jnp.logical_not(pos))
    loss = jnp.where(pos, (-alpha) * term1,
                     jnp.where(neg, (alpha - 1.0) * term2, 0.0))

    acc_ref[...] += loss                              # pure VPU accumulation

    @pl.when(pl.program_id(0) == pl.num_programs(0) - 1)
    def _():
        out_ref[0, 0] = jnp.sum(acc_ref[...])         # single final reduction


def _rowwise_path(logits, targets, gamma, alpha, tile_n):
    N, C = logits.shape
    TN = max(8, min(tile_n, _round_up(N, 8)))
    grid = (pl.cdiv(N, TN),)

    out = pl.pallas_call(
        functools.partial(_rowwise_kernel, gamma=gamma, alpha=alpha, N=N, TN=TN),
        out_shape=jax.ShapeDtypeStruct((1, 1), jnp.float32),
        grid=grid,
        in_specs=[
            pl.BlockSpec((TN, C), lambda i: (i, 0)),
            pl.BlockSpec((TN, 1), lambda i: (i, 0)),
        ],
        out_specs=pl.BlockSpec(memory_space=pltpu.SMEM),
        scratch_shapes=[pltpu.VMEM((TN, C), jnp.float32)],
        compiler_params=pltpu.CompilerParams(
            dimension_semantics=("arbitrary",)),          # sequential accumulation
    )(logits, targets.reshape(-1, 1))
    return out[0, 0]


# ---------------------------------------------------------------------------
# Public wrapper: ClsSigmoidFocalLoss(gamma, alpha)(logits, targets)
# ---------------------------------------------------------------------------
def cls_sigmoid_focal_loss_sum(logits, targets, gamma, alpha, *,
                               tile_rows=1024, tile_n=512):
    """Sum of sigmoid focal loss over all (N, C) entries (f32 scalar).

    logits:  (N, C) float (any float dtype; upcast to f32 inside the kernel)
    targets: (N,)   int class indices (1..C positive, 0 pure negative, <0 ignore)
    """
    N, C = logits.shape
    targets = targets.astype(jnp.int32)
    gamma = float(gamma)
    alpha = float(alpha)

    use_packed = (N > 0 and C >= 8 and 128 % C == 0 and N % (128 // C) == 0)
    if use_packed:
        return _packed_path(logits, targets, gamma, alpha, tile_rows)
    return _rowwise_path(logits, targets, gamma, alpha, tile_n)


def _reference(logits, targets, gamma, alpha):
    """Pure-JAX reference mirroring the PyTorch module exactly."""
    num_classes = logits.shape[1]
    class_range = jnp.arange(1, num_classes + 1, dtype=jnp.int32)[None, :]
    t = targets.astype(jnp.int32)[:, None]
    p = jax.nn.sigmoid(logits.astype(jnp.float32))
    term1 = (1.0 - p) ** gamma * jnp.log(p + 1e-6)
    term2 = p ** gamma * jnp.log(1.0 - p + 1e-6)
    pos_loss = -(t == class_range).astype(jnp.float32) * term1 * alpha
    neg_loss = -jnp.logical_and(t != class_range, t >= 0).astype(jnp.float32) \
        * term2 * (1.0 - alpha)
    return jnp.sum(pos_loss + neg_loss)


if __name__ == "__main__":
    # Module "parameters": gamma / alpha set deterministically in-script.
    gamma, alpha = 2.0, 0.25
    key = jax.random.PRNGKey(0)

    # (N, C) cases: packed/exact, packed with tail masking, general-C fallback.
    cases = [(64, 16), (200, 16), (50, 20)]
    for idx, (N, C) in enumerate(cases):
        k1, k2 = jax.random.split(jax.random.fold_in(key, idx))
        logits = jax.random.normal(k1, (N, C), dtype=jnp.float32) * 2.0
        # targets in [-1, C]: -1 = ignore row (no positive, no negative loss)
        targets = jax.random.randint(k2, (N,), minval=-1, maxval=C + 1,
                                     dtype=jnp.int32)

        out = jax.block_until_ready(
            cls_sigmoid_focal_loss_sum(logits, targets, gamma, alpha))
        ref = _reference(logits, targets, gamma, alpha)
        assert jnp.allclose(out, ref, rtol=1e-5, atol=1e-3), (N, C, out, ref)

    print("KERNEL_OK")
</pallas_src>

<mosaic_0001>
module attributes {stable_mosaic.version = 11 : i64} {
  func.func @_packed_kernel(%arg0: i32, %arg1: memref<8x128xf32, #tpu.memory_space<vmem>>, %arg2: memref<8x8xi32, #tpu.memory_space<vmem>>, %arg3: memref<8x128xf32, #tpu.memory_space<vmem>>) attributes {dimension_semantics = [#tpu.dimension_semantics<parallel>], iteration_bounds = array<i64: 1>, scalar_prefetch = 0 : i64, scratch_operands = 0 : i64, tpu.core_type = #tpu.core_type<tc>, window_params = [{transform_indices = @transform_0, window_bounds = array<i64: 8, 128>}, {transform_indices = @transform_1, window_bounds = array<i64: 8, 8>}, {transform_indices = @transform_2, window_bounds = array<i64: 8, 128>}]} {
    %c0 = arith.constant 0 : index
    %c0_0 = arith.constant 0 : index
    %0 = vector.load %arg1[%c0, %c0_0] : memref<8x128xf32, #tpu.memory_space<vmem>>, vector<8x128xf32>
    %c0_1 = arith.constant 0 : index
    %c0_2 = arith.constant 0 : index
    %1 = vector.load %arg2[%c0_1, %c0_2] : memref<8x8xi32, #tpu.memory_space<vmem>>, vector<8x8xi32>
    %2 = tpu.iota {dimensions = array<i32: 1>} : vector<8x128xi32>
    %c15_i32 = arith.constant 15 : i32
    %3 = vector.broadcast %c15_i32 : i32 to vector<8x128xi32>
    %4 = arith.andi %2, %3 : vector<8x128xi32>
    %c1_i32 = arith.constant 1 : i32
    %5 = vector.broadcast %c1_i32 : i32 to vector<8x128xi32>
    %6 = arith.addi %4, %5 : vector<8x128xi32>
    %c4_i32 = arith.constant 4 : i32
    %7 = vector.broadcast %c4_i32 : i32 to vector<8x128xi32>
    %8 = arith.shrsi %2, %7 : vector<8x128xi32>
    %c-1_i32 = arith.constant -1 : i32
    %9 = vector.broadcast %c-1_i32 : i32 to vector<8x128xi32>
    %c0_i32 = arith.constant 0 : i32
    %10 = vector.broadcast %c0_i32 : i32 to vector<8x128xi32>
    %11 = arith.cmpi eq, %8, %10 : vector<8x128xi32>
    %12 = vector.extract_strided_slice %1 {offsets = [0, 0], sizes = [8, 1], strides = [1, 1]} : vector<8x8xi32> to vector<8x1xi32>
    %13 = vector.shape_cast %12 : vector<8x1xi32> to vector<8x1xi32>
    %14 = vector.broadcast %13 : vector<8x1xi32> to vector<8x128xi32>
    %15 = arith.select %11, %14, %9 : vector<8x128xi1>, vector<8x128xi32>
    %c1_i32_3 = arith.constant 1 : i32
    %16 = vector.broadcast %c1_i32_3 : i32 to vector<8x128xi32>
    %17 = arith.cmpi eq, %8, %16 : vector<8x128xi32>
    %18 = vector.extract_strided_slice %1 {offsets = [0, 1], sizes = [8, 1], strides = [1, 1]} : vector<8x8xi32> to vector<8x1xi32>
    %19 = vector.shape_cast %18 : vector<8x1xi32> to vector<8x1xi32>
    %20 = vector.broadcast %19 : vector<8x1xi32> to vector<8x128xi32>
    %21 = arith.select %17, %20, %15 : vector<8x128xi1>, vector<8x128xi32>
    %c2_i32 = arith.constant 2 : i32
    %22 = vector.broadcast %c2_i32 : i32 to vector<8x128xi32>
    %23 = arith.cmpi eq, %8, %22 : vector<8x128xi32>
    %24 = vector.extract_strided_slice %1 {offsets = [0, 2], sizes = [8, 1], strides = [1, 1]} : vector<8x8xi32> to vector<8x1xi32>
    %25 = vector.shape_cast %24 : vector<8x1xi32> to vector<8x1xi32>
    %26 = vector.broadcast %25 : vector<8x1xi32> to vector<8x128xi32>
    %27 = arith.select %23, %26, %21 : vector<8x128xi1>, vector<8x128xi32>
    %c3_i32 = arith.constant 3 : i32
    %28 = vector.broadcast %c3_i32 : i32 to vector<8x128xi32>
    %29 = arith.cmpi eq, %8, %28 : vector<8x128xi32>
    %30 = vector.extract_strided_slice %1 {offsets = [0, 3], sizes = [8, 1], strides = [1, 1]} : vector<8x8xi32> to vector<8x1xi32>
    %31 = vector.shape_cast %30 : vector<8x1xi32> to vector<8x1xi32>
    %32 = vector.broadcast %31 : vector<8x1xi32> to vector<8x128xi32>
    %33 = arith.select %29, %32, %27 : vector<8x128xi1>, vector<8x128xi32>
    %c4_i32_4 = arith.constant 4 : i32
    %34 = vector.broadcast %c4_i32_4 : i32 to vector<8x128xi32>
    %35 = arith.cmpi eq, %8, %34 : vector<8x128xi32>
    %36 = vector.extract_strided_slice %1 {offsets = [0, 4], sizes = [8, 1], strides = [1, 1]} : vector<8x8xi32> to vector<8x1xi32>
    %37 = vector.shape_cast %36 : vector<8x1xi32> to vector<8x1xi32>
    %38 = vector.broadcast %37 : vector<8x1xi32> to vector<8x128xi32>
    %39 = arith.select %35, %38, %33 : vector<8x128xi1>, vector<8x128xi32>
    %c5_i32 = arith.constant 5 : i32
    %40 = vector.broadcast %c5_i32 : i32 to vector<8x128xi32>
    %41 = arith.cmpi eq, %8, %40 : vector<8x128xi32>
    %42 = vector.extract_strided_slice %1 {offsets = [0, 5], sizes = [8, 1], strides = [1, 1]} : vector<8x8xi32> to vector<8x1xi32>
    %43 = vector.shape_cast %42 : vector<8x1xi32> to vector<8x1xi32>
    %44 = vector.broadcast %43 : vector<8x1xi32> to vector<8x128xi32>
    %45 = arith.select %41, %44, %39 : vector<8x128xi1>, vector<8x128xi32>
    %c6_i32 = arith.constant 6 : i32
    %46 = vector.broadcast %c6_i32 : i32 to vector<8x128xi32>
    %47 = arith.cmpi eq, %8, %46 : vector<8x128xi32>
    %48 = vector.extract_strided_slice %1 {offsets = [0, 6], sizes = [8, 1], strides = [1, 1]} : vector<8x8xi32> to vector<8x1xi32>
    %49 = vector.shape_cast %48 : vector<8x1xi32> to vector<8x1xi32>
    %50 = vector.broadcast %49 : vector<8x1xi32> to vector<8x128xi32>
    %51 = arith.select %47, %50, %45 : vector<8x128xi1>, vector<8x128xi32>
    %c7_i32 = arith.constant 7 : i32
    %52 = vector.broadcast %c7_i32 : i32 to vector<8x128xi32>
    %53 = arith.cmpi eq, %8, %52 : vector<8x128xi32>
    %54 = vector.extract_strided_slice %1 {offsets = [0, 7], sizes = [8, 1], strides = [1, 1]} : vector<8x8xi32> to vector<8x1xi32>
    %55 = vector.shape_cast %54 : vector<8x1xi32> to vector<8x1xi32>
    %56 = vector.broadcast %55 : vector<8x1xi32> to vector<8x128xi32>
    %57 = arith.select %53, %56, %51 : vector<8x128xi1>, vector<8x128xi32>
    %58 = tpu.iota {dimensions = array<i32: 0>} : vector<8x1xi32>
    %c8_i32 = arith.constant 8 : i32
    %59 = arith.muli %arg0, %c8_i32 : i32
    %60 = vector.broadcast %59 : i32 to vector<8x1xi32>
    %61 = arith.addi %58, %60 : vector<8x1xi32>
    %c8_i32_5 = arith.constant 8 : i32
    %62 = vector.broadcast %c8_i32_5 : i32 to vector<8x1xi32>
    %63 = arith.cmpi slt, %61, %62 : vector<8x1xi32>
    %c-1_i32_6 = arith.constant -1 : i32
    %64 = vector.shape_cast %63 : vector<8x1xi1> to vector<8x1xi1>
    %65 = vector.broadcast %64 : vector<8x1xi1> to vector<8x128xi1>
    %66 = vector.broadcast %c-1_i32_6 : i32 to vector<8x128xi32>
    %67 = arith.select %65, %57, %66 : vector<8x128xi1>, vector<8x128xi32>
    %68 = arith.negf %0 : vector<8x128xf32>
    %69 = math.exp %68 : vector<8x128xf32>
    %cst = arith.constant 1.000000e+00 : f32
    %70 = vector.broadcast %cst : f32 to vector<8x128xf32>
    %71 = arith.addf %70, %69 : vector<8x128xf32>
    %72 = arith.divf %70, %71 : vector<8x128xf32>
    %cst_7 = arith.constant 1.000000e+00 : f32
    %73 = vector.broadcast %cst_7 : f32 to vector<8x128xf32>
    %74 = arith.subf %73, %72 : vector<8x128xf32>
    %75 = arith.mulf %74, %74 : vector<8x128xf32>
    %cst_8 = arith.constant 9.99999997E-7 : f32
    %76 = vector.broadcast %cst_8 : f32 to vector<8x128xf32>
    %77 = arith.addf %72, %76 : vector<8x128xf32>
    %78 = math.log %77 : vector<8x128xf32>
    %79 = arith.mulf %75, %78 : vector<8x128xf32>
    %80 = arith.mulf %72, %72 : vector<8x128xf32>
    %cst_9 = arith.constant 1.000000e+00 : f32
    %81 = vector.broadcast %cst_9 : f32 to vector<8x128xf32>
    %82 = arith.subf %81, %72 : vector<8x128xf32>
    %cst_10 = arith.constant 9.99999997E-7 : f32
    %83 = vector.broadcast %cst_10 : f32 to vector<8x128xf32>
    %84 = arith.addf %82, %83 : vector<8x128xf32>
    %85 = math.log %84 : vector<8x128xf32>
    %86 = arith.mulf %80, %85 : vector<8x128xf32>
    %87 = arith.cmpi eq, %67, %6 : vector<8x128xi32>
    %c0_i32_11 = arith.constant 0 : i32
    %88 = vector.broadcast %c0_i32_11 : i32 to vector<8x128xi32>
    %89 = arith.cmpi sge, %67, %88 : vector<8x128xi32>
    %cst_12 = arith.constant dense<true> : vector<8x128xi1>
    %90 = arith.xori %87, %cst_12 : vector<8x128xi1>
    %91 = arith.andi %89, %90 : vector<8x128xi1>
    %cst_13 = arith.constant -2.500000e-01 : f32
    %92 = vector.broadcast %cst_13 : f32 to vector<8x128xf32>
    %93 = arith.mulf %92, %79 : vector<8x128xf32>
    %cst_14 = arith.constant -7.500000e-01 : f32
    %94 = vector.broadcast %cst_14 : f32 to vector<8x128xf32>
    %95 = arith.mulf %94, %86 : vector<8x128xf32>
    %cst_15 = arith.constant 0.000000e+00 : f32
    %96 = vector.broadcast %cst_15 : f32 to vector<8x128xf32>
    %97 = arith.select %91, %95, %96 : vector<8x128xi1>, vector<8x128xf32>
    %98 = arith.select %87, %93, %97 : vector<8x128xi1>, vector<8x128xf32>
    %99 = vector.shape_cast %98 : vector<8x128xf32> to vector<1x8x128xf32>
    %cst_16 = arith.constant dense<0.000000e+00> : vector<8x128xf32>
    %100 = vector.multi_reduction <add>, %99, %cst_16 [0] : vector<1x8x128xf32> to vector<8x128xf32>
    %c0_17 = arith.constant 0 : index
    %c0_18 = arith.constant 0 : index
    %101 = vector.load %arg3[%c0_17, %c0_18] : memref<8x128xf32, #tpu.memory_space<vmem>>, vector<8x128xf32>
    tpu.vector_store %arg3[%c0_17, %c0_18], %100 {strides = array<i32>} : memref<8x128xf32, #tpu.memory_space<vmem>>, vector<8x128xf32>,
    return
  }
  func.func @transform_0(%arg0: i32) -> (i32, i32) {
    %c0_i32 = arith.constant 0 : i32
    %c0_i32_0 = arith.constant 0 : i32
    return %arg0, %c0_i32 : i32, i32
  }
  func.func @transform_1(%arg0: i32) -> (i32, i32) {
    %c0_i32 = arith.constant 0 : i32
    %c0_i32_0 = arith.constant 0 : i32
    return %arg0, %c0_i32 : i32, i32
  }
  func.func @transform_2(%arg0: i32) -> (i32, i32) {
    %c0_i32 = arith.constant 0 : i32
    %c0_i32_0 = arith.constant 0 : i32
    return %arg0, %c0_i32 : i32, i32
  }
}

</mosaic_0001>

<llo_original>
// kernel: tpu_custom_call.1
$region0: #{tpu_custom_call.1}
  #allocation0 [shape = 'u32[]', space=smem, size = 0x4, offset = 0x4, fixed_abs, tag = 'smem constant byte address 0x4 - core index']
  #allocation1 [shape = 'u32[72,128]{1,0:T(1,128)}', space=vmem, size = 0x9000, scoped, tag = 'internal scratch']
  %s0 = inlined_call_operand.hbm [shape: f32[8,128], index: 0, kind: input, shape index: {}]
  %s1 = inlined_call_operand.hbm [shape: s32[8,8], index: 1, kind: input, shape index: {}]
  %s2 = inlined_call_operand.hbm [shape: f32[8,128], index: 2, kind: output, shape index: {}]
  %s3 = sld [smem:[#allocation0]]
  $region26: #{tpu_custom_call.1} parent=0
    _
  %s5 = ssub.s32 1, %s3
  %s6 = scalar_select 0, %s5, %s3
  $region1: #{tpu_custom_call.1} parent=0
    #allocation2 [shape = 'u8[4096]{0}', space=vmem, size = 0x1000, scoped, tag = 'input window, operand 0, single buffered']
    #allocation3 [shape = 's32[1]{0}', space=sflag, size = 0x4, scoped, tag = 'scoped memory for tpu_custom_call.1']
    #allocation4 [shape = 's32[1]{0}', space=sflag, size = 0x4, scoped, tag = 'scoped memory for tpu_custom_call.1']
    #allocation5 [shape = 'u8[4096]{0}', space=vmem, size = 0x1000, scoped, tag = 'input window, operand 1, single buffered']
    #allocation6 [shape = 's32[1]{0}', space=sflag, size = 0x4, scoped, tag = 'scoped memory for tpu_custom_call.1']
    #allocation7 [shape = 'u8[4096]{0}', space=vmem, size = 0x1000, scoped, tag = 'output window, operand 0, single buffered']
    %7 = vsyncpa [#allocation3], 0
    %8 = vsyncpa [#allocation6], 0
    %9 = vsyncpa [#allocation4], 0
    // Predicated region
    $region2: #{tpu_custom_call.1} parent=1 // pred_check
      _
    $region3: #{tpu_custom_call.1} parent=1 // pred_check_branch
      %11 = sbr.rel (0) target = $region5
    $region4: #{tpu_custom_call.1} parent=1 // pred_region
      %13 = vsyncadd [#allocation3], 0
      %s15 = sshll.u32 %s0, 4
      %s16 = int_to_ptr.hbm [resolvable:$true] %s15
      %s17 = sshll.u32 [#allocation2], 4
      %s18 = int_to_ptr.vmem [resolvable:$true] %s17
      %20 = dma.hbm_to_vmem [thread:$0]  %s16, 128, %s18, [#allocation3]
    $region5: #{tpu_custom_call.1} parent=1 // pred_fallthru
      _
    // Predicated region
    $region6: #{tpu_custom_call.1} parent=1 // pred_check
      _
    $region7: #{tpu_custom_call.1} parent=1 // pred_check_branch
      %22 = sbr.rel (0) target = $region9
    $region8: #{tpu_custom_call.1} parent=1 // pred_region
      %24 = vsyncadd [#allocation6], 0
      %s26 = sshll.u32 %s1, 4
      %s27 = int_to_ptr.hbm [resolvable:$true] %s26
      %s28 = sshll.u32 [#allocation5], 4
      %s29 = int_to_ptr.vmem [resolvable:$true] %s28
      %31 = dma.hbm_to_vmem [thread:$0]  %s27, 128, %s29, [#allocation6]
    $region9: #{tpu_custom_call.1} parent=1 // pred_fallthru
      _
    // Predicated region
    $region10: #{tpu_custom_call.1} parent=1 // pred_check
      _
    $region11: #{tpu_custom_call.1} parent=1 // pred_check_branch
      %33 = sbr.rel (0) target = $region13
    $region12: #{tpu_custom_call.1} parent=1 // pred_region
      %35 = dma.done [#allocation3], 128
    $region13: #{tpu_custom_call.1} parent=1 // pred_fallthru
      _
    // Predicated region
    $region14: #{tpu_custom_call.1} parent=1 // pred_check
      _
    $region15: #{tpu_custom_call.1} parent=1 // pred_check_branch
      %37 = sbr.rel (0) target = $region17
    $region16: #{tpu_custom_call.1} parent=1 // pred_region
      %39 = dma.done [#allocation6], 128
    $region17: #{tpu_custom_call.1} parent=1 // pred_fallthru
      _
    %v40 = vld [vmem:[#allocation2] sm:$0xff]
    %v41 = vld [vmem:[#allocation5] sm:$0xff]
    %v42 = vlaneseq
    %v43 = vand.u32 %v42, 127
    %v44 = vand.u32 %v43, 15
    %v45 = vadd.s32 %v44, 1
    %v46 = vshra.s32 %v43, 4
    %vm47 = vcmp.eq.s32.totalorder %v46, 0
    %48 = vset.pattern.permute.xlu0 0
    %49 = vperm.xlu0 %48, %v41
    %v50 = vpop.permute.xlu0 %49
    %v51 = vsel %vm47, %v50, 4294967295
    %vm52 = vcmp.eq.s32.totalorder %v46, 1
    %53 = vset.pattern.permute.xlu0 1
    %54 = vperm.xlu0 %53, %v41
    %v55 = vpop.permute.xlu0 %54
    %v56 = vsel %vm52, %v55, %v51
    %vm57 = vcmp.eq.s32.totalorder %v46, 2
    %58 = vset.pattern.permute.xlu0 2
    %59 = vperm.xlu0 %58, %v41
    %v60 = vpop.permute.xlu0 %59
    %v61 = vsel %vm57, %v60, %v56
    %vm62 = vcmp.eq.s32.totalorder %v46, 3
    %63 = vset.pattern.permute.xlu0 3
    %64 = vperm.xlu0 %63, %v41
    %v65 = vpop.permute.xlu0 %64
    %v66 = vsel %vm62, %v65, %v61
    %vm67 = vcmp.eq.s32.totalorder %v46, 4
    %68 = vset.pattern.permute.xlu0 4
    %69 = vperm.xlu0 %68, %v41
    %v70 = vpop.permute.xlu0 %69
    %v71 = vsel %vm67, %v70, %v66
    %vm72 = vcmp.eq.s32.totalorder %v46, 5
    %73 = vset.pattern.permute.xlu0 5
    %74 = vperm.xlu0 %73, %v41
    %v75 = vpop.permute.xlu0 %74
    %v76 = vsel %vm72, %v75, %v71
    %vm77 = vcmp.eq.s32.totalorder %v46, 6
    %78 = vset.pattern.permute.xlu0 6
    %79 = vperm.xlu0 %78, %v41
    %v80 = vpop.permute.xlu0 %79
    %v81 = vsel %vm77, %v80, %v76
    %vm82 = vcmp.eq.s32.totalorder %v46, 7
    %83 = vset.pattern.permute.xlu0 7
    %84 = vperm.xlu0 %83, %v41
    %v85 = vpop.permute.xlu0 %84
    %v86 = vsel %vm82, %v85, %v81
    %v87 = vlaneseq
    %v88 = vshrl.u32 %v87, 7
    %s89 = smul.u32 0, 8
    %v90 = vstv %s89
    %v91 = vadd.s32 %v88, %v90
    %vm92 = vcmp.lt.s32.totalorder %v91, 8
    %v93 = vsel %vm92, 1, 0
    %vm94 = vcmp.eq.s32.totalorder %v93, 1
    %v95 = vsel %vm94, %v86, 4294967295
    %v96 = vxor.u32 %v40, 2147483648
    %v97 = vmul.f32 %v96, 1.442695
    %v98 = vpow.pop %v97
    %v99 = vadd.f32 %v98, 1.0
    %v100 = vrcp.pop %v99
    %v101 = vmul.f32 %v99, %v100
    %v102 = vsub.f32 1.0, %v101
    %v103 = vmul.f32 %v100, %v102
    %v104 = vadd.f32 %v100, %v103
    %vm105 = vweird.f32 %v99
    %vm106 = vweird.f32 %v100
    %vm107 = vmor %vm105, %vm106
    %v108 = vsel %vm107, %v100, %v104
    %v109 = vand.u32 2147483647, %v99
    %vm110 = vcmp.eq.f32.partialorder %v109, 8.507059e+37
    %v111 = vand.u32 %v99, 2147483648
    %v112 = vor.u32 1.1754944e-38, %v111
    %v113 = vsel %vm110, %v112, %v108
    %v114 = vmul.f32 1.0, %v113
    %v115 = vsub.f32 1.0, %v114
    %v116 = vmul.f32 %v115, %v115
    %v117 = vadd.f32 %v114, 1e-06
    %v118 = vlog2.pop %v117
    %v119 = vmul.f32 %v118, 0.6931472
    %v120 = vmul.f32 %v116, %v119
    %v121 = vmul.f32 %v114, %v114
    %v122 = vadd.f32 %v115, 1e-06
    %v123 = vlog2.pop %v122
    %v124 = vmul.f32 %v123, 0.6931472
    %v125 = vmul.f32 %v121, %v124
    %vm126 = vcmp.eq.s32.totalorder %v95, %v45
    %vm127 = vcmp.ge.s32.totalorder %v95, 0
    %vm128 = vmxor %vm126, 1
    %vm129 = vmand %vm127, %vm128
    %v130 = vmul.f32 %v120, -0.25
    %v131 = vmul.f32 %v125, -0.75
    %v132 = vsel %vm129, %v131, 0.0
    %v133 = vsel %vm126, %v130, %v132
    %v134 = vadd.f32 %v133, 0.0
    %135 = vst [vmem:[#allocation7] sm:$0xff] %v134
    // Predicated region
    $region18: #{tpu_custom_call.1} parent=1 // pred_check
      _
    $region19: #{tpu_custom_call.1} parent=1 // pred_check_branch
      %137 = sbr.rel (0) target = $region21
    $region20: #{tpu_custom_call.1} parent=1 // pred_region
      %139 = vsyncadd [#allocation4], 0
      %s141 = sshll.u32 [#allocation7], 4
      %s142 = int_to_ptr.vmem [resolvable:$true] %s141
      %s143 = sshll.u32 %s2, 4
      %s144 = int_to_ptr.hbm [resolvable:$true] %s143
      %146 = dma.vmem_to_hbm [thread:$0]  %s142, 128, %s144, [#allocation4]
    $region21: #{tpu_custom_call.1} parent=1 // pred_fallthru
      _
    // Predicated region
    $region22: #{tpu_custom_call.1} parent=1 // pred_check
      _
    $region23: #{tpu_custom_call.1} parent=1 // pred_check_branch
      %148 = sbr.rel (0) target = $region25
    $region24: #{tpu_custom_call.1} parent=1 // pred_region
      %150 = dma.done [#allocation4], 128
    $region25: #{tpu_custom_call.1} parent=1 // pred_fallthru
      _
    %151 = vsyncpa [#allocation3], 1
    %152 = vsyncpa [#allocation6], 1
    %153 = vsyncpa [#allocation4], 1

</llo_original>
